<compile_context>
chip_gen: v5e
topology: v5e:2x2
jax: 0.10.0
libtpu: 0.0.40
codegen_flags: <defaults>
</compile_context>

<pallas_src>
import functools
import math

import jax
import jax.numpy as jnp
from jax.experimental import pallas as pl
from jax.experimental.pallas import tpu as pltpu


# ----------------------------------------------------------------------------
# Fused conv + BatchNorm kernel
# ----------------------------------------------------------------------------
def _conv_bn_kernel(xpad_ref, w_ref, gamma_ref, beta_ref, o_ref,
                    stat_ref, xtaps_ref, ybuf_ref=None,
                    *, K, Cinp, Bt, L, Lpad, n_total, eps, stash):
    """One grid step = one (phase, batch-tile) pair.

    xpad_ref : (Bt, Cinp, Lpad + K - 1)  padded input tile (VMEM)
    w_ref    : (Cout, K*Cinp)            conv weight, tap-stacked
    gamma_ref: (Cout, 1)                 BN gamma (f32)
    beta_ref : (Cout, 1)                 BN beta  (f32)
    o_ref    : (Bt, Cout, Lpad)          output tile (lane dim = Lpad)
    stat_ref : (2, Cout, 128)            lane-partial [sum, sum_sq] of conv out (f32)
    xtaps_ref: (K*Cinp, Lpad)            tap-stacked rhs slab for the MXU dot
    ybuf_ref : (B_pad, Cout, Lpad) f32   conv-output stash (only when stash=True)
    """
    phase = pl.program_id(0)
    tile = pl.program_id(1)
    cout = o_ref.shape[1]
    n_groups = Lpad // 128

    def compute_y(b):
        # Stack the K conv taps (static, sublane-aligned stores) -> one MXU dot with
        # contraction depth K*Cinp instead of K accumulated depth-Cin dots.
        for k in range(K):
            xtaps_ref[k * Cinp:(k + 1) * Cinp, :] = xpad_ref[b, :, k:k + Lpad]
        y = jnp.dot(w_ref[...], xtaps_ref[...],
                    preferred_element_type=jnp.float32)          # (Cout, Lpad) f32
        if L != Lpad:
            col = jax.lax.broadcasted_iota(jnp.int32, (cout, Lpad), 1)
            y = jnp.where(col < L, y, 0.0)   # keep padded lanes out of BN statistics
        return y

    @pl.when(phase == 0)
    def _stats_pass():
        @pl.when(tile == 0)
        def _():
            stat_ref[...] = jnp.zeros_like(stat_ref)
        s0 = jnp.zeros((cout, 128), jnp.float32)
        s1 = jnp.zeros((cout, 128), jnp.float32)
        for b in range(Bt):                       # Bt is small & static -> unrolled
            y = compute_y(b)
            if stash:
                ybuf_ref[tile * Bt + b] = y
            # Lane-partial accumulation (VPU adds only); the cross-lane XLU reduce is
            # deferred to phase 1.
            if n_groups <= 32:
                for g in range(n_groups):
                    yg = y[:, g * 128:(g + 1) * 128]
                    s0 = s0 + yg
                    s1 = s1 + yg * yg
            else:
                yr = y.reshape(cout, n_groups, 128)
                s0 = s0 + jnp.sum(yr, axis=1)
                s1 = s1 + jnp.sum(yr * yr, axis=1)
        stat_ref[0] += s0
        stat_ref[1] += s1

    @pl.when(phase == 1)
    def _normalize_pass():
        # NOTE: E[y^2]-E[y]^2 in f32; guarded by max(.,0). Fine for OS_CNN-scale B*L.
        mean = jnp.sum(stat_ref[0], axis=-1, keepdims=True) / n_total       # (Cout, 1)
        ex2 = jnp.sum(stat_ref[1], axis=-1, keepdims=True) / n_total
        var = jnp.maximum(ex2 - mean * mean, 0.0)    # biased variance (torch BN training)
        scale = jax.lax.rsqrt(var + eps) * gamma_ref[...]                   # (Cout, 1)
        shift = beta_ref[...] - mean * scale                                # (Cout, 1)
        for b in range(Bt):
            y = ybuf_ref[tile * Bt + b] if stash else compute_y(b)
            o_ref[b] = (y * scale + shift).astype(o_ref.dtype)


# ----------------------------------------------------------------------------
# Wrapper: SampaddingConv1D_BN.forward
# ----------------------------------------------------------------------------
def sampadding_conv1d_bn(x, weight, bias=None, gamma=None, beta=None, *,
                         eps=1e-5, matmul_dtype=jnp.bfloat16, batch_tile=None,
                         max_batch_tile=16,
                         io_vmem_budget=8 * 1024 * 1024,
                         stash_vmem_budget=12 * 1024 * 1024):
    """x: (B, Cin, L) NCW, weight: (Cout, Cin, K). Returns (B, Cout, L)."""
    B, Cin, L = x.shape
    Cout, Cin_w, K = weight.shape
    assert Cin_w == Cin
    out_dtype = x.dtype

    if gamma is None:
        gamma = jnp.ones((Cout,), jnp.float32)
    if beta is None:
        beta = jnp.zeros((Cout,), jnp.float32)
    # Conv bias cancels exactly under training-mode BatchNorm (it is added to y and removed
    # again with the batch mean) -> accepted for API parity, not computed.
    del bias

    cdt = jnp.dtype(jnp.float32 if matmul_dtype is None else matmul_dtype)
    sub = {4: 8, 2: 16, 1: 32}.get(cdt.itemsize, 8)

    Lpad = max(128, ((L + 127) // 128) * 128)            # lane-dense output (cropped after)
    Cinp = max(sub, ((Cin + sub - 1) // sub) * sub)      # sublane-aligned tap stacking
    left, right = (K - 1) // 2, K // 2                   # ConstantPad1d((⌊(K-1)/2⌋, ⌊K/2⌋), 0)
    Lpadp = Lpad + K - 1

    # Batch tile sized against a conservative VMEM budget (double-buffered in/out blocks),
    # capped to bound in-kernel unrolling; sized safely below the v7x 64 MiB / 32 MiB-scoped
    # limit so no vmem_limit override is needed.
    per_sample = 2 * Cinp * Lpadp * cdt.itemsize + 2 * Cout * Lpad * jnp.dtype(out_dtype).itemsize
    if batch_tile is None:
        Bt = int(max(1, min(B, max_batch_tile, io_vmem_budget // max(per_sample, 1))))
    else:
        Bt = int(max(1, min(B, batch_tile)))
    nb = -(-B // Bt)
    B_pad = nb * Bt           # zero batch padding contributes exactly 0 to the BN sums

    stash = (B_pad * Cout * Lpad * 4) <= stash_vmem_budget

    xpad = jnp.pad(x.astype(cdt),
                   ((0, B_pad - B), (0, Cinp - Cin), (left, right + (Lpad - L))))
    w2 = jnp.transpose(jnp.pad(weight, ((0, 0), (0, Cinp - Cin), (0, 0))),
                       (0, 2, 1)).reshape(Cout, K * Cinp).astype(cdt)      # (Cout, K*Cinp)
    g2 = gamma.reshape(Cout, 1).astype(jnp.float32)
    b2 = beta.reshape(Cout, 1).astype(jnp.float32)

    kernel = functools.partial(_conv_bn_kernel, K=K, Cinp=Cinp, Bt=Bt, L=L,
                               Lpad=Lpad, n_total=float(B * L), eps=eps, stash=stash)

    scratch = [pltpu.VMEM((2, Cout, 128), jnp.float32),   # lane-partial [sum, sum_sq]
               pltpu.VMEM((K * Cinp, Lpad), cdt)]         # tap-stacked matmul rhs
    if stash:
        scratch.append(pltpu.VMEM((B_pad, Cout, Lpad), jnp.float32))   # conv-output stash

    if stash:
        # Phase 1 never touches x: keep the block index parked on the last phase-0 tile so
        # no input DMA is issued during the whole normalize pass.
        x_map = lambda p, t: ((1 - p) * t + p * (nb - 1), 0, 0)
    else:
        x_map = lambda p, t: (t, 0, 0)

    out = pl.pallas_call(
        kernel,
        grid=(2, nb),   # axis 0 = phase (stats pass / normalize pass), axis 1 = batch tile
        in_specs=[
            pl.BlockSpec((Bt, Cinp, Lpadp), x_map),                    # batch-tiled input slab
            pl.BlockSpec((Cout, K * Cinp), lambda p, t: (0, 0)),       # weights (resident)
            pl.BlockSpec((Cout, 1), lambda p, t: (0, 0)),              # gamma
            pl.BlockSpec((Cout, 1), lambda p, t: (0, 0)),              # beta
        ],
        # All phase-0 steps map to block 0 -> output HBM is written exactly once (phase 1).
        out_specs=pl.BlockSpec((Bt, Cout, Lpad), lambda p, t: (p * t, 0, 0)),
        out_shape=jax.ShapeDtypeStruct((B_pad, Cout, Lpad), out_dtype),
        scratch_shapes=scratch,
        compiler_params=pltpu.CompilerParams(
            dimension_semantics=("arbitrary", "arbitrary")),
    )(xpad, w2, g2, b2)
    return out[:B, :, :L]


# ----------------------------------------------------------------------------
# Plain-JAX reference (im2col conv + training-mode BN) for validation
# ----------------------------------------------------------------------------
def _reference(x, weight, bias, gamma, beta, eps=1e-5):
    B, Cin, L = x.shape
    Cout, _, K = weight.shape
    left, right = (K - 1) // 2, K // 2
    xpad = jnp.pad(x, ((0, 0), (0, 0), (left, right)))
    idx = jnp.arange(L)[:, None] + jnp.arange(K)[None, :]            # (L, K)
    patches = xpad[:, :, idx]                                        # (B, Cin, L, K)
    y = jnp.einsum('bclk,ock->bol', patches, weight) + bias[None, :, None]
    mean = jnp.mean(y, axis=(0, 2), keepdims=True)
    var = jnp.mean((y - mean) ** 2, axis=(0, 2), keepdims=True)      # biased
    yhat = (y - mean) * jax.lax.rsqrt(var + eps)
    return yhat * gamma[None, :, None] + beta[None, :, None]


if __name__ == "__main__":
    # Small shapes consistent with the module: X is (batch, in_channels, length).
    B, Cin, Cout, K, L = 2, 4, 8, 5, 16

    key = jax.random.PRNGKey(0)
    kx, kw, kb, kg, kbe = jax.random.split(key, 5)
    x = jax.random.normal(kx, (B, Cin, L), jnp.float32)

    bound = 1.0 / math.sqrt(Cin * K)                                  # Conv1d default init
    weight = jax.random.uniform(kw, (Cout, Cin, K), jnp.float32, -bound, bound)
    bias = jax.random.uniform(kb, (Cout,), jnp.float32, -bound, bound)
    gamma = jax.random.uniform(kg, (Cout,), jnp.float32, 0.5, 1.5)    # non-trivial affine
    beta = 0.1 * jax.random.normal(kbe, (Cout,), jnp.float32)

    ref = _reference(x, weight, bias, gamma, beta)

    # Exact-fidelity f32-matmul path.
    out_f32 = jax.block_until_ready(
        sampadding_conv1d_bn(x, weight, bias, gamma, beta, matmul_dtype=jnp.float32))
    assert out_f32.shape == (B, Cout, L), out_f32.shape
    err = float(jnp.max(jnp.abs(out_f32 - ref)))
    assert err < 1e-3, f"f32 path max abs err vs reference = {err}"

    # Default bf16-matmul path (BN stats / normalization stay f32) — relaxed tolerance.
    out_bf16 = jax.block_until_ready(sampadding_conv1d_bn(x, weight, bias, gamma, beta))
    assert out_bf16.shape == (B, Cout, L), out_bf16.shape
    err_bf = float(jnp.max(jnp.abs(out_bf16 - ref)))
    assert err_bf < 5e-2, f"bf16 path max abs err vs reference = {err_bf}"

    print("KERNEL_OK")
</pallas_src>

<mosaic_0001>
module attributes {stable_mosaic.version = 11 : i64} {
  func.func @_conv_bn_kernel(%arg0: i32, %arg1: i32, %arg2: memref<2x8x132xf32, #tpu.memory_space<vmem>>, %arg3: memref<8x40xf32, #tpu.memory_space<vmem>>, %arg4: memref<8x1xf32, #tpu.memory_space<vmem>>, %arg5: memref<8x1xf32, #tpu.memory_space<vmem>>, %arg6: memref<2x8x128xf32, #tpu.memory_space<vmem>>, %arg7: memref<2x8x128xf32, #tpu.memory_space<vmem>>, %arg8: memref<40x128xf32, #tpu.memory_space<vmem>>, %arg9: memref<2x8x128xf32, #tpu.memory_space<vmem>>) attributes {dimension_semantics = [#tpu.dimension_semantics<arbitrary>, #tpu.dimension_semantics<arbitrary>], iteration_bounds = array<i64: 2, 1>, scalar_prefetch = 0 : i64, scratch_operands = 3 : i64, tpu.core_type = #tpu.core_type<tc>, window_params = [{transform_indices = @transform_0, window_bounds = array<i64: 2, 8, 132>}, {pipeline_mode = #tpu.pipeline_mode<synchronous>, transform_indices = @transform_1, window_bounds = array<i64: 8, 40>}, {pipeline_mode = #tpu.pipeline_mode<synchronous>, transform_indices = @transform_2, window_bounds = array<i64: 8, 1>}, {pipeline_mode = #tpu.pipeline_mode<synchronous>, transform_indices = @transform_3, window_bounds = array<i64: 8, 1>}, {transform_indices = @transform_4, window_bounds = array<i64: 2, 8, 128>}]} {
    %c0_i32 = arith.constant 0 : i32
    %0 = arith.cmpi eq, %arg0, %c0_i32 : i32
    %1 = arith.extui %0 : i1 to i32
    %c0_i32_0 = arith.constant 0 : i32
    %2 = arith.cmpi ne, %1, %c0_i32_0 : i32
    scf.if %2 {
      %c0_i32_2 = arith.constant 0 : i32
      %6 = arith.cmpi eq, %arg1, %c0_i32_2 : i32
      %7 = arith.extui %6 : i1 to i32
      %c0_i32_3 = arith.constant 0 : i32
      %8 = arith.cmpi ne, %7, %c0_i32_3 : i32
      scf.if %8 {
        %cst_78 = arith.constant 0.000000e+00 : f32
        %87 = vector.broadcast %cst_78 : f32 to vector<2x8x128xf32>
        %c0_79 = arith.constant 0 : index
        %c0_80 = arith.constant 0 : index
        %c0_81 = arith.constant 0 : index
        %88 = vector.load %arg7[%c0_79, %c0_80, %c0_81] : memref<2x8x128xf32, #tpu.memory_space<vmem>>, vector<2x8x128xf32>
        tpu.vector_store %arg7[%c0_79, %c0_80, %c0_81], %87 {strides = array<i32>} : memref<2x8x128xf32, #tpu.memory_space<vmem>>, vector<2x8x128xf32>,
      } else {
      }
      %cst = arith.constant 0.000000e+00 : f32
      %9 = vector.broadcast %cst : f32 to vector<8x128xf32>
      %cst_4 = arith.constant 0.000000e+00 : f32
      %10 = vector.broadcast %cst_4 : f32 to vector<8x128xf32>
      %c0 = arith.constant 0 : index
      %c0_5 = arith.constant 0 : index
      %c0_6 = arith.constant 0 : index
      %11 = vector.load %arg2[%c0, %c0_5, %c0_6] : memref<2x8x132xf32, #tpu.memory_space<vmem>>, vector<1x8x128xf32>
      %12 = vector.shape_cast %11 : vector<1x8x128xf32> to vector<8x128xf32>
      %c0_7 = arith.constant 0 : index
      %c0_8 = arith.constant 0 : index
      %13 = vector.load %arg8[%c0_7, %c0_8] : memref<40x128xf32, #tpu.memory_space<vmem>>, vector<8x128xf32>
      tpu.vector_store %arg8[%c0_7, %c0_8], %12 {strides = array<i32>} : memref<40x128xf32, #tpu.memory_space<vmem>>, vector<8x128xf32>,
      %c0_9 = arith.constant 0 : index
      %c0_10 = arith.constant 0 : index
      %c1 = arith.constant 1 : index
      %14 = vector.load %arg2[%c0_9, %c0_10, %c1] : memref<2x8x132xf32, #tpu.memory_space<vmem>>, vector<1x8x128xf32>
      %15 = vector.shape_cast %14 : vector<1x8x128xf32> to vector<8x128xf32>
      %c8 = arith.constant 8 : index
      %c0_11 = arith.constant 0 : index
      %16 = vector.load %arg8[%c8, %c0_11] : memref<40x128xf32, #tpu.memory_space<vmem>>, vector<8x128xf32>
      tpu.vector_store %arg8[%c8, %c0_11], %15 {strides = array<i32>} : memref<40x128xf32, #tpu.memory_space<vmem>>, vector<8x128xf32>,
      %c0_12 = arith.constant 0 : index
      %c0_13 = arith.constant 0 : index
      %c2 = arith.constant 2 : index
      %17 = vector.load %arg2[%c0_12, %c0_13, %c2] : memref<2x8x132xf32, #tpu.memory_space<vmem>>, vector<1x8x128xf32>
      %18 = vector.shape_cast %17 : vector<1x8x128xf32> to vector<8x128xf32>
      %c16 = arith.constant 16 : index
      %c0_14 = arith.constant 0 : index
      %19 = vector.load %arg8[%c16, %c0_14] : memref<40x128xf32, #tpu.memory_space<vmem>>, vector<8x128xf32>
      tpu.vector_store %arg8[%c16, %c0_14], %18 {strides = array<i32>} : memref<40x128xf32, #tpu.memory_space<vmem>>, vector<8x128xf32>,
      %c0_15 = arith.constant 0 : index
      %c0_16 = arith.constant 0 : index
      %c3 = arith.constant 3 : index
      %20 = vector.load %arg2[%c0_15, %c0_16, %c3] : memref<2x8x132xf32, #tpu.memory_space<vmem>>, vector<1x8x128xf32>
      %21 = vector.shape_cast %20 : vector<1x8x128xf32> to vector<8x128xf32>
      %c24 = arith.constant 24 : index
      %c0_17 = arith.constant 0 : index
      %22 = vector.load %arg8[%c24, %c0_17] : memref<40x128xf32, #tpu.memory_space<vmem>>, vector<8x128xf32>
      tpu.vector_store %arg8[%c24, %c0_17], %21 {strides = array<i32>} : memref<40x128xf32, #tpu.memory_space<vmem>>, vector<8x128xf32>,
      %c0_18 = arith.constant 0 : index
      %c0_19 = arith.constant 0 : index
      %c4 = arith.constant 4 : index
      %23 = vector.load %arg2[%c0_18, %c0_19, %c4] : memref<2x8x132xf32, #tpu.memory_space<vmem>>, vector<1x8x128xf32>
      %24 = vector.shape_cast %23 : vector<1x8x128xf32> to vector<8x128xf32>
      %c32 = arith.constant 32 : index
      %c0_20 = arith.constant 0 : index
      %25 = vector.load %arg8[%c32, %c0_20] : memref<40x128xf32, #tpu.memory_space<vmem>>, vector<8x128xf32>
      tpu.vector_store %arg8[%c32, %c0_20], %24 {strides = array<i32>} : memref<40x128xf32, #tpu.memory_space<vmem>>, vector<8x128xf32>,
      %c0_21 = arith.constant 0 : index
      %c0_22 = arith.constant 0 : index
      %26 = vector.load %arg3[%c0_21, %c0_22] : memref<8x40xf32, #tpu.memory_space<vmem>>, vector<8x40xf32>
      %c0_23 = arith.constant 0 : index
      %c0_24 = arith.constant 0 : index
      %27 = vector.load %arg8[%c0_23, %c0_24] : memref<40x128xf32, #tpu.memory_space<vmem>>, vector<40x128xf32>
      %cst_25 = arith.constant dense<0.000000e+00> : vector<8x128xf32>
      %28 = tpu.matmul %26, %27, %cst_25 {dimension_numbers = #tpu.dot_dimension_numbers<[1], [0], [0], [1], [0, 0, 1, 1], [], []>} : vector<8x40xf32>, vector<40x128xf32>, vector<8x128xf32> -> vector<8x128xf32>
      %29 = tpu.iota {dimensions = array<i32: 1>} : vector<8x128xi32>
      %c16_i32 = arith.constant 16 : i32
      %30 = vector.broadcast %c16_i32 : i32 to vector<8x128xi32>
      %31 = arith.cmpi slt, %29, %30 : vector<8x128xi32>
      %cst_26 = arith.constant 0.000000e+00 : f32
      %32 = vector.broadcast %cst_26 : f32 to vector<8x128xf32>
      %33 = arith.select %31, %28, %32 : vector<8x128xi1>, vector<8x128xf32>
      %c2_i32 = arith.constant 2 : i32
      %34 = arith.muli %arg1, %c2_i32 : i32
      %c0_i32_27 = arith.constant 0 : i32
      %35 = arith.addi %34, %c0_i32_27 : i32
      %36 = arith.index_cast %35 : i32 to index
      %c0_28 = arith.constant 0 : index
      %c0_29 = arith.constant 0 : index
      %37 = vector.load %arg9[%36, %c0_28, %c0_29] : memref<2x8x128xf32, #tpu.memory_space<vmem>>, vector<1x8x128xf32>
      %38 = vector.shape_cast %37 : vector<1x8x128xf32> to vector<8x128xf32>
      %39 = vector.shape_cast %33 : vector<8x128xf32> to vector<1x8x128xf32>
      tpu.vector_store %arg9[%36, %c0_28, %c0_29], %39 {strides = array<i32>} : memref<2x8x128xf32, #tpu.memory_space<vmem>>, vector<1x8x128xf32>,
      %40 = arith.addf %9, %33 : vector<8x128xf32>
      %41 = arith.mulf %33, %33 : vector<8x128xf32>
      %42 = arith.addf %10, %41 : vector<8x128xf32>
      %c1_30 = arith.constant 1 : index
      %c0_31 = arith.constant 0 : index
      %c0_32 = arith.constant 0 : index
      %43 = vector.load %arg2[%c1_30, %c0_31, %c0_32] : memref<2x8x132xf32, #tpu.memory_space<vmem>>, vector<1x8x128xf32>
      %44 = vector.shape_cast %43 : vector<1x8x128xf32> to vector<8x128xf32>
      %c0_33 = arith.constant 0 : index
      %c0_34 = arith.constant 0 : index
      %45 = vector.load %arg8[%c0_33, %c0_34] : memref<40x128xf32, #tpu.memory_space<vmem>>, vector<8x128xf32>
      tpu.vector_store %arg8[%c0_33, %c0_34], %44 {strides = array<i32>} : memref<40x128xf32, #tpu.memory_space<vmem>>, vector<8x128xf32>,
      %c1_35 = arith.constant 1 : index
      %c0_36 = arith.constant 0 : index
      %c1_37 = arith.constant 1 : index
      %46 = vector.load %arg2[%c1_35, %c0_36, %c1_37] : memref<2x8x132xf32, #tpu.memory_space<vmem>>, vector<1x8x128xf32>
      %47 = vector.shape_cast %46 : vector<1x8x128xf32> to vector<8x128xf32>
      %c8_38 = arith.constant 8 : index
      %c0_39 = arith.constant 0 : index
      %48 = vector.load %arg8[%c8_38, %c0_39] : memref<40x128xf32, #tpu.memory_space<vmem>>, vector<8x128xf32>
      tpu.vector_store %arg8[%c8_38, %c0_39], %47 {strides = array<i32>} : memref<40x128xf32, #tpu.memory_space<vmem>>, vector<8x128xf32>,
      %c1_40 = arith.constant 1 : index
      %c0_41 = arith.constant 0 : index
      %c2_42 = arith.constant 2 : index
      %49 = vector.load %arg2[%c1_40, %c0_41, %c2_42] : memref<2x8x132xf32, #tpu.memory_space<vmem>>, vector<1x8x128xf32>
      %50 = vector.shape_cast %49 : vector<1x8x128xf32> to vector<8x128xf32>
      %c16_43 = arith.constant 16 : index
      %c0_44 = arith.constant 0 : index
      %51 = vector.load %arg8[%c16_43, %c0_44] : memref<40x128xf32, #tpu.memory_space<vmem>>, vector<8x128xf32>
      tpu.vector_store %arg8[%c16_43, %c0_44], %50 {strides = array<i32>} : memref<40x128xf32, #tpu.memory_space<vmem>>, vector<8x128xf32>,
      %c1_45 = arith.constant 1 : index
      %c0_46 = arith.constant 0 : index
      %c3_47 = arith.constant 3 : index
      %52 = vector.load %arg2[%c1_45, %c0_46, %c3_47] : memref<2x8x132xf32, #tpu.memory_space<vmem>>, vector<1x8x128xf32>
      %53 = vector.shape_cast %52 : vector<1x8x128xf32> to vector<8x128xf32>
      %c24_48 = arith.constant 24 : index
      %c0_49 = arith.constant 0 : index
      %54 = vector.load %arg8[%c24_48, %c0_49] : memref<40x128xf32, #tpu.memory_space<vmem>>, vector<8x128xf32>
      tpu.vector_store %arg8[%c24_48, %c0_49], %53 {strides = array<i32>} : memref<40x128xf32, #tpu.memory_space<vmem>>, vector<8x128xf32>,
      %c1_50 = arith.constant 1 : index
      %c0_51 = arith.constant 0 : index
      %c4_52 = arith.constant 4 : index
      %55 = vector.load %arg2[%c1_50, %c0_51, %c4_52] : memref<2x8x132xf32, #tpu.memory_space<vmem>>, vector<1x8x128xf32>
      %56 = vector.shape_cast %55 : vector<1x8x128xf32> to vector<8x128xf32>
      %c32_53 = arith.constant 32 : index
      %c0_54 = arith.constant 0 : index
      %57 = vector.load %arg8[%c32_53, %c0_54] : memref<40x128xf32, #tpu.memory_space<vmem>>, vector<8x128xf32>
      tpu.vector_store %arg8[%c32_53, %c0_54], %56 {strides = array<i32>} : memref<40x128xf32, #tpu.memory_space<vmem>>, vector<8x128xf32>,
      %c0_55 = arith.constant 0 : index
      %c0_56 = arith.constant 0 : index
      %58 = vector.load %arg3[%c0_55, %c0_56] : memref<8x40xf32, #tpu.memory_space<vmem>>, vector<8x40xf32>
      %c0_57 = arith.constant 0 : index
      %c0_58 = arith.constant 0 : index
      %59 = vector.load %arg8[%c0_57, %c0_58] : memref<40x128xf32, #tpu.memory_space<vmem>>, vector<40x128xf32>
      %cst_59 = arith.constant dense<0.000000e+00> : vector<8x128xf32>
      %60 = tpu.matmul %58, %59, %cst_59 {dimension_numbers = #tpu.dot_dimension_numbers<[1], [0], [0], [1], [0, 0, 1, 1], [], []>} : vector<8x40xf32>, vector<40x128xf32>, vector<8x128xf32> -> vector<8x128xf32>
      %61 = tpu.iota {dimensions = array<i32: 1>} : vector<8x128xi32>
      %c16_i32_60 = arith.constant 16 : i32
      %62 = vector.broadcast %c16_i32_60 : i32 to vector<8x128xi32>
      %63 = arith.cmpi slt, %61, %62 : vector<8x128xi32>
      %cst_61 = arith.constant 0.000000e+00 : f32
      %64 = vector.broadcast %cst_61 : f32 to vector<8x128xf32>
      %65 = arith.select %63, %60, %64 : vector<8x128xi1>, vector<8x128xf32>
      %c2_i32_62 = arith.constant 2 : i32
      %66 = arith.muli %arg1, %c2_i32_62 : i32
      %c1_i32_63 = arith.constant 1 : i32
      %67 = arith.addi %66, %c1_i32_63 : i32
      %68 = arith.index_cast %67 : i32 to index
      %c0_64 = arith.constant 0 : index
      %c0_65 = arith.constant 0 : index
      %69 = vector.load %arg9[%68, %c0_64, %c0_65] : memref<2x8x128xf32, #tpu.memory_space<vmem>>, vector<1x8x128xf32>
      %70 = vector.shape_cast %69 : vector<1x8x128xf32> to vector<8x128xf32>
      %71 = vector.shape_cast %65 : vector<8x128xf32> to vector<1x8x128xf32>
      tpu.vector_store %arg9[%68, %c0_64, %c0_65], %71 {strides = array<i32>} : memref<2x8x128xf32, #tpu.memory_space<vmem>>, vector<1x8x128xf32>,
      %72 = arith.addf %40, %65 : vector<8x128xf32>
      %73 = arith.mulf %65, %65 : vector<8x128xf32>
      %74 = arith.addf %42, %73 : vector<8x128xf32>
      %c0_66 = arith.constant 0 : index
      %c0_67 = arith.constant 0 : index
      %c0_68 = arith.constant 0 : index
      %75 = vector.load %arg7[%c0_66, %c0_67, %c0_68] : memref<2x8x128xf32, #tpu.memory_space<vmem>>, vector<1x8x128xf32>
      %76 = vector.shape_cast %75 : vector<1x8x128xf32> to vector<8x128xf32>
      %77 = arith.addf %76, %72 : vector<8x128xf32>
      %c0_69 = arith.constant 0 : index
      %c0_70 = arith.constant 0 : index
      %c0_71 = arith.constant 0 : index
      %78 = vector.load %arg7[%c0_69, %c0_70, %c0_71] : memref<2x8x128xf32, #tpu.memory_space<vmem>>, vector<1x8x128xf32>
      %79 = vector.shape_cast %78 : vector<1x8x128xf32> to vector<8x128xf32>
      %80 = vector.shape_cast %77 : vector<8x128xf32> to vector<1x8x128xf32>
      tpu.vector_store %arg7[%c0_69, %c0_70, %c0_71], %80 {strides = array<i32>} : memref<2x8x128xf32, #tpu.memory_space<vmem>>, vector<1x8x128xf32>,
      %c1_72 = arith.constant 1 : index
      %c0_73 = arith.constant 0 : index
      %c0_74 = arith.constant 0 : index
      %81 = vector.load %arg7[%c1_72, %c0_73, %c0_74] : memref<2x8x128xf32, #tpu.memory_space<vmem>>, vector<1x8x128xf32>
      %82 = vector.shape_cast %81 : vector<1x8x128xf32> to vector<8x128xf32>
      %83 = arith.addf %82, %74 : vector<8x128xf32>
      %c1_75 = arith.constant 1 : index
      %c0_76 = arith.constant 0 : index
      %c0_77 = arith.constant 0 : index
      %84 = vector.load %arg7[%c1_75, %c0_76, %c0_77] : memref<2x8x128xf32, #tpu.memory_space<vmem>>, vector<1x8x128xf32>
      %85 = vector.shape_cast %84 : vector<1x8x128xf32> to vector<8x128xf32>
      %86 = vector.shape_cast %83 : vector<8x128xf32> to vector<1x8x128xf32>
      tpu.vector_store %arg7[%c1_75, %c0_76, %c0_77], %86 {strides = array<i32>} : memref<2x8x128xf32, #tpu.memory_space<vmem>>, vector<1x8x128xf32>,
    } else {
    }
    %c1_i32 = arith.constant 1 : i32
    %3 = arith.cmpi eq, %arg0, %c1_i32 : i32
    %4 = arith.extui %3 : i1 to i32
    %c0_i32_1 = arith.constant 0 : i32
    %5 = arith.cmpi ne, %4, %c0_i32_1 : i32
    scf.if %5 {
      %c0 = arith.constant 0 : index
      %c0_2 = arith.constant 0 : index
      %c0_3 = arith.constant 0 : index
      %6 = vector.load %arg7[%c0, %c0_2, %c0_3] : memref<2x8x128xf32, #tpu.memory_space<vmem>>, vector<1x8x128xf32>
      %7 = vector.shape_cast %6 : vector<1x8x128xf32> to vector<8x128xf32>
      %cst = arith.constant dense<0.000000e+00> : vector<8xf32>
      %8 = vector.multi_reduction <add>, %7, %cst [1] : vector<8x128xf32> to vector<8xf32>
      %9 = vector.shape_cast %8 : vector<8xf32> to vector<8x1xf32>
      %cst_4 = arith.constant 3.200000e+01 : f32
      %10 = vector.broadcast %cst_4 : f32 to vector<8x1xf32>
      %11 = arith.divf %9, %10 : vector<8x1xf32>
      %c1 = arith.constant 1 : index
      %c0_5 = arith.constant 0 : index
      %c0_6 = arith.constant 0 : index
      %12 = vector.load %arg7[%c1, %c0_5, %c0_6] : memref<2x8x128xf32, #tpu.memory_space<vmem>>, vector<1x8x128xf32>
      %13 = vector.shape_cast %12 : vector<1x8x128xf32> to vector<8x128xf32>
      %cst_7 = arith.constant dense<0.000000e+00> : vector<8xf32>
      %14 = vector.multi_reduction <add>, %13, %cst_7 [1] : vector<8x128xf32> to vector<8xf32>
      %15 = vector.shape_cast %14 : vector<8xf32> to vector<8x1xf32>
      %cst_8 = arith.constant 3.200000e+01 : f32
      %16 = vector.broadcast %cst_8 : f32 to vector<8x1xf32>
      %17 = arith.divf %15, %16 : vector<8x1xf32>
      %18 = arith.mulf %11, %11 : vector<8x1xf32>
      %19 = arith.subf %17, %18 : vector<8x1xf32>
      %cst_9 = arith.constant 0.000000e+00 : f32
      %20 = vector.broadcast %cst_9 : f32 to vector<8x1xf32>
      %21 = arith.maximumf %19, %20 : vector<8x1xf32>
      %cst_10 = arith.constant 9.99999974E-6 : f32
      %22 = vector.broadcast %cst_10 : f32 to vector<8x1xf32>
      %23 = arith.addf %21, %22 : vector<8x1xf32>
      %24 = math.rsqrt %23 : vector<8x1xf32>
      %c0_11 = arith.constant 0 : index
      %c0_12 = arith.constant 0 : index
      %25 = vector.load %arg4[%c0_11, %c0_12] : memref<8x1xf32, #tpu.memory_space<vmem>>, vector<8x1xf32>
      %26 = arith.mulf %24, %25 : vector<8x1xf32>
      %c0_13 = arith.constant 0 : index
      %c0_14 = arith.constant 0 : index
      %27 = vector.load %arg5[%c0_13, %c0_14] : memref<8x1xf32, #tpu.memory_space<vmem>>, vector<8x1xf32>
      %28 = arith.mulf %11, %26 : vector<8x1xf32>
      %29 = arith.subf %27, %28 : vector<8x1xf32>
      %c2_i32 = arith.constant 2 : i32
      %30 = arith.muli %arg1, %c2_i32 : i32
      %c0_i32_15 = arith.constant 0 : i32
      %31 = arith.addi %30, %c0_i32_15 : i32
      %32 = arith.index_cast %31 : i32 to index
      %c0_16 = arith.constant 0 : index
      %c0_17 = arith.constant 0 : index
      %33 = vector.load %arg9[%32, %c0_16, %c0_17] : memref<2x8x128xf32, #tpu.memory_space<vmem>>, vector<1x8x128xf32>
      %34 = vector.shape_cast %33 : vector<1x8x128xf32> to vector<8x128xf32>
      %35 = vector.broadcast %26 : vector<8x1xf32> to vector<8x128xf32>
      %36 = arith.mulf %34, %35 : vector<8x128xf32>
      %37 = vector.broadcast %29 : vector<8x1xf32> to vector<8x128xf32>
      %38 = arith.addf %36, %37 : vector<8x128xf32>
      %c0_18 = arith.constant 0 : index
      %c0_19 = arith.constant 0 : index
      %c0_20 = arith.constant 0 : index
      %39 = vector.load %arg6[%c0_18, %c0_19, %c0_20] : memref<2x8x128xf32, #tpu.memory_space<vmem>>, vector<1x8x128xf32>
      %40 = vector.shape_cast %39 : vector<1x8x128xf32> to vector<8x128xf32>
      %41 = vector.shape_cast %38 : vector<8x128xf32> to vector<1x8x128xf32>
      tpu.vector_store %arg6[%c0_18, %c0_19, %c0_20], %41 {strides = array<i32>} : memref<2x8x128xf32, #tpu.memory_space<vmem>>, vector<1x8x128xf32>,
      %c2_i32_21 = arith.constant 2 : i32
      %42 = arith.muli %arg1, %c2_i32_21 : i32
      %c1_i32_22 = arith.constant 1 : i32
      %43 = arith.addi %42, %c1_i32_22 : i32
      %44 = arith.index_cast %43 : i32 to index
      %c0_23 = arith.constant 0 : index
      %c0_24 = arith.constant 0 : index
      %45 = vector.load %arg9[%44, %c0_23, %c0_24] : memref<2x8x128xf32, #tpu.memory_space<vmem>>, vector<1x8x128xf32>
      %46 = vector.shape_cast %45 : vector<1x8x128xf32> to vector<8x128xf32>
      %47 = vector.broadcast %26 : vector<8x1xf32> to vector<8x128xf32>
      %48 = arith.mulf %46, %47 : vector<8x128xf32>
      %49 = vector.broadcast %29 : vector<8x1xf32> to vector<8x128xf32>
      %50 = arith.addf %48, %49 : vector<8x128xf32>
      %c1_25 = arith.constant 1 : index
      %c0_26 = arith.constant 0 : index
      %c0_27 = arith.constant 0 : index
      %51 = vector.load %arg6[%c1_25, %c0_26, %c0_27] : memref<2x8x128xf32, #tpu.memory_space<vmem>>, vector<1x8x128xf32>
      %52 = vector.shape_cast %51 : vector<1x8x128xf32> to vector<8x128xf32>
      %53 = vector.shape_cast %50 : vector<8x128xf32> to vector<1x8x128xf32>
      tpu.vector_store %arg6[%c1_25, %c0_26, %c0_27], %53 {strides = array<i32>} : memref<2x8x128xf32, #tpu.memory_space<vmem>>, vector<1x8x128xf32>,
    } else {
    }
    return
  }
  func.func @transform_0(%arg0: i32, %arg1: i32) -> (i32, i32, i32) {
    %c1_i32 = arith.constant 1 : i32
    %0 = arith.subi %c1_i32, %arg0 : i32
    %1 = arith.muli %0, %arg1 : i32
    %c0_i32 = arith.constant 0 : i32
    %2 = arith.muli %arg0, %c0_i32 : i32
    %3 = arith.addi %1, %2 : i32
    %c0_i32_0 = arith.constant 0 : i32
    %c0_i32_1 = arith.constant 0 : i32
    %c0_i32_2 = arith.constant 0 : i32
    return %3, %c0_i32_0, %c0_i32_1 : i32, i32, i32
  }
  func.func @transform_1(%arg0: i32, %arg1: i32) -> (i32, i32) {
    %c0_i32 = arith.constant 0 : i32
    %c0_i32_0 = arith.constant 0 : i32
    %c0_i32_1 = arith.constant 0 : i32
    return %c0_i32, %c0_i32_0 : i32, i32
  }
  func.func @transform_2(%arg0: i32, %arg1: i32) -> (i32, i32) {
    %c0_i32 = arith.constant 0 : i32
    %c0_i32_0 = arith.constant 0 : i32
    %c0_i32_1 = arith.constant 0 : i32
    return %c0_i32, %c0_i32_0 : i32, i32
  }
  func.func @transform_3(%arg0: i32, %arg1: i32) -> (i32, i32) {
    %c0_i32 = arith.constant 0 : i32
    %c0_i32_0 = arith.constant 0 : i32
    %c0_i32_1 = arith.constant 0 : i32
    return %c0_i32, %c0_i32_0 : i32, i32
  }
  func.func @transform_4(%arg0: i32, %arg1: i32) -> (i32, i32, i32) {
    %0 = arith.muli %arg0, %arg1 : i32
    %c0_i32 = arith.constant 0 : i32
    %c0_i32_0 = arith.constant 0 : i32
    %c0_i32_1 = arith.constant 0 : i32
    return %0, %c0_i32, %c0_i32_0 : i32, i32, i32
  }
}

</mosaic_0001>

<llo_original>
// kernel: tpu_custom_call.1
$region0: #{tpu_custom_call.1}
  #allocation0 [shape = 'u32[]', space=smem, size = 0x4, offset = 0x4, fixed_abs, tag = 'smem constant byte address 0x4 - core index']
  #allocation1 [shape = 'u32[72,128]{1,0:T(1,128)}', space=vmem, size = 0x9000, scoped, tag = 'internal scratch']
  #allocation2 [shape = 'f32[2,8,128]{2,1,0:T(8,128)}', space=vmem, size = 0x2000, scoped, tag = 'scratch operand']
  #allocation3 [shape = 'f32[40,128]{1,0:T(8,128)}', space=vmem, size = 0x5000, scoped, tag = 'scratch operand']
  #allocation4 [shape = 'f32[2,8,128]{2,1,0:T(8,128)}', space=vmem, size = 0x2000, scoped, tag = 'scratch operand']
  %s0 = inlined_call_operand.hbm [shape: f32[2,8,132], index: 0, kind: input, shape index: {}]
  %s1 = inlined_call_operand.vmem [shape: f32[8,40], index: 1, kind: input, shape index: {}]
  %s2 = inlined_call_operand.vmem [shape: f32[8,1], index: 2, kind: input, shape index: {}]
  %s3 = inlined_call_operand.vmem [shape: f32[8,1], index: 3, kind: input, shape index: {}]
  %s4 = inlined_call_operand.hbm [shape: f32[2,8,128], index: 4, kind: output, shape index: {}]
  %s5 = sld [smem:[#allocation0]]
  $region65: #{tpu_custom_call.1} parent=0
    _
  %s7 = ssub.s32 1, %s5
  %s8 = scalar_select 0, %s7, %s5
  $region1: #{tpu_custom_call.1} parent=0
    #allocation5 [shape = 'u8[32768]{0}', space=vmem, size = 0x8000, scoped, tag = 'input window, operand 0']
    #allocation6 [shape = 's32[2]{0}', space=sflag, size = 0x8, scoped, tag = 'scoped memory for tpu_custom_call.1']
    #allocation7 [shape = 's32[2]{0}', space=sflag, size = 0x8, scoped, tag = 'scoped memory for tpu_custom_call.1']
    #allocation8 [shape = 'u8[16384]{0}', space=vmem, size = 0x4000, scoped, tag = 'output window, operand 0']
    %9 = vsyncpa [#allocation6], 0
    %s10 = scalar_lea.sflag [#allocation6], 1
    %11 = vsyncpa %s10, 0
    %12 = vsyncpa [#allocation7], 0
    %s13 = scalar_lea.sflag [#allocation7], 1
    %14 = vsyncpa %s13, 0
    loop: start=0, step=1, limit=4
    $region2: #{tpu_custom_call.1} parent=1 // loop_pre_header
      _
    $region3: #{tpu_custom_call.1} parent=1 // loop_header
      %s16 = sphi 0, %s20
      %p17 = scmp.ge.s32.totalorder %s16, 4
      %s23 = sphi 0, %s35
      %s24 = sphi 0, %s31
      %s25 = sphi 0, %s23
      %s26 = sphi 0, %s24
      %s27 = sphi 0, %s25
      %s28 = sphi 0, %s26
      %s42 = sphi 0, %s44
      %s45 = sphi 0, %s42
      %s46 = sphi 0, %s45
      %s62 = sphi 0, %s46
      %s66 = sphi 0, %s66
      %s68 = sphi 0, %s66
      %s69 = sphi 0, %s68
      %s83 = sphi 0, %s69
      %s87 = sphi 0, %s87
      %s89 = sphi 0, %s87
      %s90 = sphi 0, %s89
      %s104 = sphi 0, %s90
      %s108 = sphi 0, %s108
      %s110 = sphi 0, %s108
      %s111 = sphi 0, %s110
      %s125 = sphi 0, %s111
      %s133 = sphi 0, %s135
      %s136 = sphi 0, %s133
      %s137 = sphi 0, %s136
      %s153 = sphi 0, %s137
    $region4: #{tpu_custom_call.1} parent=1 // loop_header_branch
      %19 = sbr.rel (%p17) target = $region8
    $region5: #{tpu_custom_call.1} parent=1 // loop_body
      %s21 = ssub.s32 %s16, 1
      %s22 = ssub.s32 %s16, 2
      %s29 = sadd.s32 1, %s24
      %p30 = scmp.ge.s32.totalorder %s29, 1
      %s31 = scalar_select %p30, 0, %s29
      %s32 = sadd.s32 1, %s23
      %s33 = scalar_select %p30, %s32, %s23
      %p34 = scmp.ge.s32.totalorder %s33, 2
      %s35 = scalar_select %p34, 0, %s33
      %s36 = ssub.s32 1, %s23
      %s37 = smul.u32 %s36, %s24
      %s38 = ssub.s32 1, %s35
      %s39 = smul.u32 %s38, %s31
      %s40 = ssub.s32 %s37, %s39
      %p41 = scmp.eq.s32.totalorder %s40, 0
      %s43 = sadd.s32 %s42, 1
      %s44 = scalar_select %p41, %s42, %s43
      %p47 = pneg %p41
      %p48 = scmp.eq.s32.totalorder %s16, 1
      %p49 = por %p47, %p48
      %p50 = scmp.ne.s32.totalorder %s42, %s45
      %p51 = scmp.eq.s32.totalorder %s16, 0
      %p52 = por %p50, %p51
      %p53 = scmp.ne.s32.totalorder %s42, %s45
      %p54 = scmp.eq.s32.totalorder %s21, 1
      %p55 = por %p53, %p54
      %p56 = scmp.ne.s32.totalorder %s45, %s46
      %p57 = scmp.eq.s32.totalorder %s21, 0
      %p58 = por %p56, %p57
      %p59 = scmp.ne.s32.totalorder %s45, %s46
      %p60 = scmp.eq.s32.totalorder %s22, 1
      %p61 = por %p59, %p60
      %p63 = scmp.ne.s32.totalorder %s46, %s62
      %p64 = scmp.eq.s32.totalorder %s22, 0
      %p65 = por %p63, %p64
      %s67 = sadd.s32 %s66, 1
      %p70 = scmp.eq.s32.totalorder %s16, 1
      %p71 = scmp.ne.s32.totalorder %s66, %s68
      %p72 = scmp.eq.s32.totalorder %s16, 0
      %p73 = por %p71, %p72
      %p74 = scmp.ne.s32.totalorder %s66, %s68
      %p75 = scmp.eq.s32.totalorder %s21, 1
      %p76 = por %p74, %p75
      %p77 = scmp.ne.s32.totalorder %s68, %s69
      %p78 = scmp.eq.s32.totalorder %s21, 0
      %p79 = por %p77, %p78
      %p80 = scmp.ne.s32.totalorder %s68, %s69
      %p81 = scmp.eq.s32.totalorder %s22, 1
      %p82 = por %p80, %p81
      %p84 = scmp.ne.s32.totalorder %s69, %s83
      %p85 = scmp.eq.s32.totalorder %s22, 0
      %p86 = por %p84, %p85
      %s88 = sadd.s32 %s87, 1
      %p91 = scmp.eq.s32.totalorder %s16, 1
      %p92 = scmp.ne.s32.totalorder %s87, %s89
      %p93 = scmp.eq.s32.totalorder %s16, 0
      %p94 = por %p92, %p93
      %p95 = scmp.ne.s32.totalorder %s87, %s89
      %p96 = scmp.eq.s32.totalorder %s21, 1
      %p97 = por %p95, %p96
      %p98 = scmp.ne.s32.totalorder %s89, %s90
      %p99 = scmp.eq.s32.totalorder %s21, 0
      %p100 = por %p98, %p99
      %p101 = scmp.ne.s32.totalorder %s89, %s90
      %p102 = scmp.eq.s32.totalorder %s22, 1
      %p103 = por %p101, %p102
      %p105 = scmp.ne.s32.totalorder %s90, %s104
      %p106 = scmp.eq.s32.totalorder %s22, 0
      %p107 = por %p105, %p106
      %s109 = sadd.s32 %s108, 1
      %p112 = scmp.eq.s32.totalorder %s16, 1
      %p113 = scmp.ne.s32.totalorder %s108, %s110
      %p114 = scmp.eq.s32.totalorder %s16, 0
      %p115 = por %p113, %p114
      %p116 = scmp.ne.s32.totalorder %s108, %s110
      %p117 = scmp.eq.s32.totalorder %s21, 1
      %p118 = por %p116, %p117
      %p119 = scmp.ne.s32.totalorder %s110, %s111
      %p120 = scmp.eq.s32.totalorder %s21, 0
      %p121 = por %p119, %p120
      %p122 = scmp.ne.s32.totalorder %s110, %s111
      %p123 = scmp.eq.s32.totalorder %s22, 1
      %p124 = por %p122, %p123
      %p126 = scmp.ne.s32.totalorder %s111, %s125
      %p127 = scmp.eq.s32.totalorder %s22, 0
      %p128 = por %p126, %p127
      %s129 = smul.u32 %s23, %s24
      %s130 = smul.u32 %s35, %s31
      %s131 = ssub.s32 %s129, %s130
      %p132 = scmp.eq.s32.totalorder %s131, 0
      %s134 = sadd.s32 %s133, 1
      %s135 = scalar_select %p132, %s133, %s134
      %p138 = pneg %p132
      %p139 = scmp.eq.s32.totalorder %s16, 1
      %p140 = por %p138, %p139
      %p141 = scmp.ne.s32.totalorder %s133, %s136
      %p142 = scmp.eq.s32.totalorder %s16, 0
      %p143 = por %p141, %p142
      %p144 = scmp.ne.s32.totalorder %s133, %s136
      %p145 = scmp.eq.s32.totalorder %s21, 1
      %p146 = por %p144, %p145
      %p147 = scmp.ne.s32.totalorder %s136, %s137
      %p148 = scmp.eq.s32.totalorder %s21, 0
      %p149 = por %p147, %p148
      %p150 = scmp.ne.s32.totalorder %s136, %s137
      %p151 = scmp.eq.s32.totalorder %s22, 1
      %p152 = por %p150, %p151
      %p154 = scmp.ne.s32.totalorder %s137, %s153
      %p155 = scmp.eq.s32.totalorder %s22, 0
      %p156 = por %p154, %p155
      %p157 = scmp.le.s32.totalorder 1, %s16
      %p158 = scmp.lt.s32.totalorder %s16, 3
      %p159 = pnand %p157, %p158
      %p160 = pneg %p159
      // Predicated region
      $region9: #{tpu_custom_call.1} parent=5 // pred_check
        _
      $region10: #{tpu_custom_call.1} parent=5 // pred_check_branch
        %162 = sbr.rel (%p159) target = $region12
      $region11: #{tpu_custom_call.1} parent=5 // pred_region
        %s163 = ssub.s32 %s16, 1
        // Predicated region
        $region13: #{tpu_custom_call.1} parent=11 // pred_check
          %p164 = pneg %p79
        $region14: #{tpu_custom_call.1} parent=11 // pred_check_branch
          %166 = sbr.rel (%p164) target = $region16
        $region15: #{tpu_custom_call.1} parent=11 // pred_region
          _
        $region16: #{tpu_custom_call.1} parent=11 // pred_fallthru
          _
        // Predicated region
        $region17: #{tpu_custom_call.1} parent=11 // pred_check
          %p167 = pneg %p100
        $region18: #{tpu_custom_call.1} parent=11 // pred_check_branch
          %169 = sbr.rel (%p167) target = $region20
        $region19: #{tpu_custom_call.1} parent=11 // pred_region
          _
        $region20: #{tpu_custom_call.1} parent=11 // pred_fallthru
          _
        // Predicated region
        $region21: #{tpu_custom_call.1} parent=11 // pred_check
          %p170 = pneg %p121
        $region22: #{tpu_custom_call.1} parent=11 // pred_check_branch
          %172 = sbr.rel (%p170) target = $region24
        $region23: #{tpu_custom_call.1} parent=11 // pred_region
          _
        $region24: #{tpu_custom_call.1} parent=11 // pred_fallthru
          _
      $region12: #{tpu_custom_call.1} parent=5 // pred_fallthru
        _
      %p173 = scmp.lt.s32.totalorder %s16, 2
      // Predicated region
      $region25: #{tpu_custom_call.1} parent=5 // pred_check
        %p174 = pneg %p173
      $region26: #{tpu_custom_call.1} parent=5 // pred_check_branch
        %176 = sbr.rel (%p174) target = $region28
      $region27: #{tpu_custom_call.1} parent=5 // pred_region
        // Predicated region
        $region29: #{tpu_custom_call.1} parent=27 // pred_check
          %p177 = pneg %p52
        $region30: #{tpu_custom_call.1} parent=27 // pred_check_branch
          %179 = sbr.rel (%p177) target = $region32
        $region31: #{tpu_custom_call.1} parent=27 // pred_region
          %s180 = sand.u32 %s42, 1
          %s181 = scalar_lea.sflag [#allocation6], %s180
          %s182 = sand.u32 %s42, 1
          %s183 = smul.addr %s182, 32
          %s184 = scalar_lea.vmem [#allocation5], %s183
          %s185 = ssub.s32 1, %s23
          %s186 = smul.u32 %s185, %s24
          %s187 = smul.u32 2, %s186
          %189 = vsyncadd %s181, 0
          %s190 = smul.addr %s187, 2
          %s191 = smul.addr %s190, 8
          %s192 = scalar_lea.hbm %s0, %s191
          %s193 = sshll.u32 %s192, 4
          %s194 = int_to_ptr.hbm [resolvable:$true] %s193
          %s195 = sshll.u32 %s184, 4
          %s196 = int_to_ptr.vmem [resolvable:$true] %s195
          %201 = dma.hbm_to_vmem [thread:$0]  %s194, 512, %s196, %s181, 256, 256, 16
        $region32: #{tpu_custom_call.1} parent=27 // pred_fallthru
          _
      $region28: #{tpu_custom_call.1} parent=5 // pred_fallthru
        _
      %p202 = scmp.le.s32.totalorder 1, %s16
      %p203 = scmp.lt.s32.totalorder %s16, 3
      %p204 = pnand %p202, %p203
      %p205 = pneg %p204
      // Predicated region
      $region33: #{tpu_custom_call.1} parent=5 // pred_check
        _
      $region34: #{tpu_custom_call.1} parent=5 // pred_check_branch
        %207 = sbr.rel (%p204) target = $region36
      $region35: #{tpu_custom_call.1} parent=5 // pred_region
        %s208 = ssub.s32 %s16, 1
        %s209 = sand.u32 %s45, 1
        %s210 = scalar_lea.sflag [#allocation6], %s209
        %s211 = sand.u32 %s45, 1
        %s212 = smul.addr %s211, 32
        %s213 = scalar_lea.vmem [#allocation5], %s212
        // Predicated region
        $region37: #{tpu_custom_call.1} parent=35 // pred_check
          %p214 = pneg %p58
        $region38: #{tpu_custom_call.1} parent=35 // pred_check_branch
          %216 = sbr.rel (%p214) target = $region40
        $region39: #{tpu_custom_call.1} parent=35 // pred_region
          %218 = dma.done %s210, 512
        $region40: #{tpu_custom_call.1} parent=35 // pred_fallthru
          _
        %s219 = sand.u32 %s45, 1
        %s220 = scalar_lea.sflag [#allocation6], %s219
        %s221 = sand.u32 %s45, 1
        %s222 = smul.addr %s221, 32
        %s223 = scalar_lea.vmem [#allocation5], %s222
        %p224 = pneg %p58
        %p225 = pneg %p55
        %p226 = pneg %p79
        %p227 = pneg %p76
        %p228 = pneg %p100
        %p229 = pneg %p97
        %p230 = pneg %p121
        %p231 = pneg %p118
        %p232 = pneg %p149
        %p233 = pneg %p146
        %s234 = sand.u32 %s136, 1
        %s235 = scalar_lea.sflag [#allocation7], %s234
        %s236 = sand.u32 %s136, 1
        %s237 = smul.addr %s236, 16
        %s238 = scalar_lea.vmem [#allocation8], %s237
        %s239 = ssub.s32 1, %s25
        %s240 = smul.u32 %s239, %s26
        %s241 = smul.u32 2, %s240
        %s242 = smul.u32 %s25, %s26
        %s243 = smul.u32 2, %s242
        %p244 = scmp.eq.s32.totalorder %s25, 0
        // Predicated region
        $region41: #{tpu_custom_call.1} parent=35 // pred_check
          %p245 = pneg %p244
        $region42: #{tpu_custom_call.1} parent=35 // pred_check_branch
          %247 = sbr.rel (%p245) target = $region44
        $region43: #{tpu_custom_call.1} parent=35 // pred_region
          %p248 = scmp.eq.s32.totalorder %s26, 0
          // Predicated region
          $region45: #{tpu_custom_call.1} parent=43 // pred_check
            %p249 = pneg %p248
          $region46: #{tpu_custom_call.1} parent=43 // pred_check_branch
            %251 = sbr.rel (%p249) target = $region48
          $region47: #{tpu_custom_call.1} parent=43 // pred_region
            %252 = vst [vmem:[#allocation2] sm:$0xff] 0.0
            %253 = vst [vmem:[#allocation2 + $0x8] sm:$0xff] 0.0
          $region48: #{tpu_custom_call.1} parent=43 // pred_fallthru
            _
          %v254 = vld [vmem:[%s213] sm:$0xff]
          %255 = vst [vmem:[#allocation3] sm:$0xff] %v254
          %v256 = vld [vmem:[%s213] sm:$0xff]
          %v257 = vld [vmem:[%s213 + $0x8] sm:$0xff]
          %260 = vrot.lane.b32.xlu0 %v256, 127
          %v261 = vpop.permute.xlu0 %260
          %262 = vrot.lane.b32.xlu0 %v257, 127
          %v263 = vpop.permute.xlu0 %262
          %vm264 = vcmask 1039360
          %v265 = vsel %vm264, %v261, %v263
          %267 = vst [vmem:[#allocation3 + $0x8] sm:$0xff] %v265
          %v268 = vld [vmem:[%s213] sm:$0xff]
          %v269 = vld [vmem:[%s213 + $0x8] sm:$0xff]
          %272 = vrot.lane.b32.xlu0 %v268, 126
          %v273 = vpop.permute.xlu0 %272
          %274 = vrot.lane.b32.xlu0 %v269, 126
          %v275 = vpop.permute.xlu0 %274
          %vm276 = vcmask 1031168
          %v277 = vsel %vm276, %v273, %v275
          %279 = vst [vmem:[#allocation3 + $0x10] sm:$0xff] %v277
          %v280 = vld [vmem:[%s213] sm:$0xff]
          %v281 = vld [vmem:[%s213 + $0x8] sm:$0xff]
          %284 = vrot.lane.b32.xlu0 %v280, 125
          %v285 = vpop.permute.xlu0 %284
          %286 = vrot.lane.b32.xlu0 %v281, 125
          %v287 = vpop.permute.xlu0 %286
          %vm288 = vcmask 1022976
          %v289 = vsel %vm288, %v285, %v287
          %291 = vst [vmem:[#allocation3 + $0x18] sm:$0xff] %v289
          %v292 = vld [vmem:[%s213] sm:$0xff]
          %v293 = vld [vmem:[%s213 + $0x8] sm:$0xff]
          %296 = vrot.lane.b32.xlu0 %v292, 124
          %v297 = vpop.permute.xlu0 %296
          %298 = vrot.lane.b32.xlu0 %v293, 124
          %v299 = vpop.permute.xlu0 %298
          %vm300 = vcmask 1014784
          %v301 = vsel %vm300, %v297, %v299
          %303 = vst [vmem:[#allocation3 + $0x20] sm:$0xff] %v301
          %v304 = vld [vmem:[%s1] sm:$0xff]
          %v305 = vld [vmem:[#allocation3] sm:$0xff]
          %v306 = vld [vmem:[#allocation3 + $0x8] sm:$0xff]
          %v307 = vld [vmem:[#allocation3 + $0x10] sm:$0xff]
          %v308 = vld [vmem:[#allocation3 + $0x18] sm:$0xff]
          %v309 = vld [vmem:[#allocation3 + $0x20] sm:$0xff]
          %vm310 = vcmask 326656
          %v312 = vsel %vm310, %v304, 0
          %314 = vmatpush.msra.mxu0 0.0
          %315 = vmatpush.msra.mxu0 0.0
          %316 = vmatpush.msra.mxu0 0.0
          %317 = vmatpush.msra.mxu0 0.0
          %318 = vmatpush.msra.mxu0 0.0
          %319 = vmatpush.msra.mxu0 0.0
          %320 = vmatpush.msra.mxu0 0.0
          %321 = vmatpush.msra.mxu0 0.0
          %322 = vmatpush.msra.mxu0 0.0
          %323 = vmatpush.msra.mxu0 0.0
          %324 = vmatpush.msra.mxu0 0.0
          %325 = vmatpush.msra.mxu0 %v309
          %326 = vmatpush.msra.mxu0 %v308
          %327 = vmatpush.msra.mxu0 %v307
          %328 = vmatpush.msra.mxu0 %v306
          %329 = vmatpush.msra.mxu0 %v305
          %330 = vmatmul.f32.gmra.mxu0 %v312
          %v331 = vpop.f32.mrf.mxu0
          %v332 = vadd.f32 0.0, %v331
          %333 = vdwg.mxu0
          %v334 = vlaneseq
          %v335 = vand.u32 %v334, 127
          %vm336 = vcmp.lt.s32.totalorder %v335, 16
          %v337 = vsel %vm336, %v332, 0.0
          %s338 = smul.u32 %s26, 2
          %s339 = smul.u32 %s338, 8
          %s340 = scalar_lea.vmem [#allocation4], %s339
          %341 = vst [vmem:[%s340] sm:$0xff] %v337
          %v342 = vadd.f32 %v337, 0.0
          %v343 = vmul.f32 %v337, %v337
          %v344 = vadd.f32 %v343, 0.0
          %s345 = scalar_lea.vmem %s213, 16 [#allocation5]
          %v346 = vld [vmem:[%s345] sm:$0xff]
          %347 = vst [vmem:[#allocation3] sm:$0xff] %v346
          %v348 = vld [vmem:[%s345] sm:$0xff]
          %v349 = vld [vmem:[%s345 + $0x8] sm:$0xff]
          %352 = vrot.lane.b32.xlu0 %v348, 127
          %v353 = vpop.permute.xlu0 %352
          %354 = vrot.lane.b32.xlu0 %v349, 127
          %v355 = vpop.permute.xlu0 %354
          %v356 = vsel %vm264, %v353, %v355
          %358 = vst [vmem:[#allocation3 + $0x8] sm:$0xff] %v356
          %v359 = vld [vmem:[%s345] sm:$0xff]
          %v360 = vld [vmem:[%s345 + $0x8] sm:$0xff]
          %363 = vrot.lane.b32.xlu0 %v359, 126
          %v364 = vpop.permute.xlu0 %363
          %365 = vrot.lane.b32.xlu0 %v360, 126
          %v366 = vpop.permute.xlu0 %365
          %v367 = vsel %vm276, %v364, %v366
          %369 = vst [vmem:[#allocation3 + $0x10] sm:$0xff] %v367
          %v370 = vld [vmem:[%s345] sm:$0xff]
          %v371 = vld [vmem:[%s345 + $0x8] sm:$0xff]
          %374 = vrot.lane.b32.xlu0 %v370, 125
          %v375 = vpop.permute.xlu0 %374
          %376 = vrot.lane.b32.xlu0 %v371, 125
          %v377 = vpop.permute.xlu0 %376
          %v378 = vsel %vm288, %v375, %v377
          %380 = vst [vmem:[#allocation3 + $0x18] sm:$0xff] %v378
          %v381 = vld [vmem:[%s345] sm:$0xff]
          %v382 = vld [vmem:[%s345 + $0x8] sm:$0xff]
          %385 = vrot.lane.b32.xlu0 %v381, 124
          %v386 = vpop.permute.xlu0 %385
          %387 = vrot.lane.b32.xlu0 %v382, 124
          %v388 = vpop.permute.xlu0 %387
          %v389 = vsel %vm300, %v386, %v388
          %391 = vst [vmem:[#allocation3 + $0x20] sm:$0xff] %v389
          %v392 = vld [vmem:[%s1] sm:$0xff]
          %v393 = vld [vmem:[#allocation3] sm:$0xff]
          %v394 = vld [vmem:[#allocation3 + $0x8] sm:$0xff]
          %v395 = vld [vmem:[#allocation3 + $0x10] sm:$0xff]
          %v396 = vld [vmem:[#allocation3 + $0x18] sm:$0xff]
          %v397 = vld [vmem:[#allocation3 + $0x20] sm:$0xff]
          %v399 = vsel %vm310, %v392, 0
          %401 = vmatpush.msra.mxu0 0.0
          %402 = vmatpush.msra.mxu0 0.0
          %403 = vmatpush.msra.mxu0 0.0
          %404 = vmatpush.msra.mxu0 0.0
          %405 = vmatpush.msra.mxu0 0.0
          %406 = vmatpush.msra.mxu0 0.0
          %407 = vmatpush.msra.mxu0 0.0
          %408 = vmatpush.msra.mxu0 0.0
          %409 = vmatpush.msra.mxu0 0.0
          %410 = vmatpush.msra.mxu0 0.0
          %411 = vmatpush.msra.mxu0 0.0
          %412 = vmatpush.msra.mxu0 %v397
          %413 = vmatpush.msra.mxu0 %v396
          %414 = vmatpush.msra.mxu0 %v395
          %415 = vmatpush.msra.mxu0 %v394
          %416 = vmatpush.msra.mxu0 %v393
          %417 = vmatmul.f32.gmra.mxu0 %v399
          %v418 = vpop.f32.mrf.mxu0
          %v419 = vadd.f32 0.0, %v418
          %420 = vdwg.mxu0
          %v421 = vsel %vm336, %v419, 0.0
          %s422 = sadd.s32 %s338, 1
          %s423 = smul.u32 %s422, 8
          %s424 = scalar_lea.vmem [#allocation4], %s423
          %425 = vst [vmem:[%s424] sm:$0xff] %v421
          %v426 = vadd.f32 %v342, %v421
          %v427 = vmul.f32 %v421, %v421
          %v428 = vadd.f32 %v344, %v427
          %v429 = vld [vmem:[#allocation2] sm:$0xff]
          %v430 = vadd.f32 %v429, %v426
          %431 = vst [vmem:[#allocation2] sm:$0xff] %v430
          %s432 = scalar_lea.vmem [#allocation2], 8
          %v433 = vld [vmem:[%s432] sm:$0xff]
          %v434 = vadd.f32 %v433, %v428
          %435 = vst [vmem:[%s432] sm:$0xff] %v434
        $region44: #{tpu_custom_call.1} parent=35 // pred_fallthru
          _
        %p436 = scmp.eq.s32.totalorder %s25, 1
        // Predicated region
        $region49: #{tpu_custom_call.1} parent=35 // pred_check
          %p437 = pneg %p436
        $region50: #{tpu_custom_call.1} parent=35 // pred_check_branch
          %439 = sbr.rel (%p437) target = $region52
        $region51: #{tpu_custom_call.1} parent=35 // pred_region
          %v440 = vld [vmem:[#allocation2] sm:$0xff]
          %441 = vadd.xlane.f32.xlu0 %v440
          %v442 = vpop.xlane.xlu0 %441
          %v443 = vrcp.pop 32.0
          %v444 = vmul.f32 32.0, %v443
          %v445 = vsub.f32 1.0, %v444
          %v446 = vmul.f32 %v443, %v445
          %v447 = vadd.f32 %v443, %v446
          %vm448 = vweird.f32 %v443
          %v449 = vsel %vm448, %v443, %v447
          %v450 = vmul.f32 %v442, %v449
          %s451 = scalar_lea.vmem [#allocation2], 8
          %v452 = vld [vmem:[%s451] sm:$0xff]
          %453 = vadd.xlane.f32.xlu0 %v452
          %v454 = vpop.xlane.xlu0 %453
          %v455 = vmul.f32 %v454, %v449
          %v456 = vmul.f32 %v450, %v450
          %v457 = vsub.f32 %v455, %v456
          %v458 = vmax.f32 %v457, 0.0
          %v459 = vadd.f32 %v458, 1e-05
          %v460 = vrsqrt.pop %v459
          %v461 = vmul.f32 %v460, %v459
          %v462 = vmul.f32 %v461, %v460
          %v463 = vmul.f32 0.5, %v462
          %v464 = vsub.f32 1.5, %v463
          %v465 = vmul.f32 %v460, %v464
          %vm466 = vweird.f32 %v459
          %vm467 = vweird.f32 %v460
          %vm468 = vmor %vm466, %vm467
          %v469 = vsel %vm468, %v460, %v465
          %v470 = vld [vmem:[%s2] sm:$0xff]
          %v471 = vmul.f32 %v469, %v470
          %v472 = vld [vmem:[%s3] sm:$0xff]
          %v473 = vmul.f32 %v450, %v471
          %v474 = vsub.f32 %v472, %v473
          %s475 = smul.u32 %s26, 2
          %s476 = smul.u32 %s475, 8
          %s477 = scalar_lea.vmem [#allocation4], %s476
          %v478 = vld [vmem:[%s477] sm:$0xff]
          %480 = vset.pattern.permute.xlu0 0
          %481 = vperm.xlu0 %480, %v471
          %v482 = vpop.permute.xlu0 %481
          %v484 = vmul.f32 %v478, %v482
          %486 = vset.pattern.permute.xlu0 0
          %487 = vperm.xlu0 %486, %v474
          %v488 = vpop.permute.xlu0 %487
          %v490 = vadd.f32 %v484, %v488
          %491 = vst [vmem:[%s238] sm:$0xff] %v490
          %s492 = sadd.s32 %s475, 1
          %s493 = smul.u32 %s492, 8
          %s494 = scalar_lea.vmem [#allocation4], %s493
          %v495 = vld [vmem:[%s494] sm:$0xff]
          %v496 = vmul.f32 %v495, %v482
          %v497 = vadd.f32 %v496, %v488
          %s498 = scalar_lea.vmem %s238, 8 [#allocation8]
          %499 = vst [vmem:[%s498] sm:$0xff] %v497
        $region52: #{tpu_custom_call.1} parent=35 // pred_fallthru
          _
        %s500 = sand.u32 %s136, 1
        %s501 = scalar_lea.sflag [#allocation7], %s500
        %s502 = sand.u32 %s136, 1
        %s503 = smul.addr %s502, 16
        %s504 = scalar_lea.vmem [#allocation8], %s503
        // Predicated region
        $region53: #{tpu_custom_call.1} parent=35 // pred_check
          %p505 = pneg %p146
        $region54: #{tpu_custom_call.1} parent=35 // pred_check_branch
          %507 = sbr.rel (%p505) target = $region56
        $region55: #{tpu_custom_call.1} parent=35 // pred_region
          %s508 = smul.u32 %s25, %s26
          %s509 = smul.u32 2, %s508
          %511 = vsyncadd %s501, 0
          %s512 = smul.addr %s509, 8
          %s513 = scalar_lea.hbm %s4, %s512
          %s514 = sshll.u32 %s504, 4
          %s515 = int_to_ptr.vmem [resolvable:$true] %s514
          %s516 = sshll.u32 %s513, 4
          %s517 = int_to_ptr.hbm [resolvable:$true] %s516
          %522 = dma.vmem_to_hbm [thread:$0]  %s515, 256, %s517, %s501, 128, 128, 8
        $region56: #{tpu_custom_call.1} parent=35 // pred_fallthru
          _
      $region36: #{tpu_custom_call.1} parent=5 // pred_fallthru
        _
      %p523 = scmp.le.s32.totalorder 2, %s16
      // Predicated region
      $region57: #{tpu_custom_call.1} parent=5 // pred_check
        %p524 = pneg %p523
      $region58: #{tpu_custom_call.1} parent=5 // pred_check_branch
        %526 = sbr.rel (%p524) target = $region60
      $region59: #{tpu_custom_call.1} parent=5 // pred_region
        %s527 = ssub.s32 %s16, 2
        // Predicated region
        $region61: #{tpu_custom_call.1} parent=59 // pred_check
          %p528 = pneg %p152
        $region62: #{tpu_custom_call.1} parent=59 // pred_check_branch
          %530 = sbr.rel (%p528) target = $region64
        $region63: #{tpu_custom_call.1} parent=59 // pred_region
          %s531 = sand.u32 %s137, 1
          %s532 = scalar_lea.sflag [#allocation7], %s531
          %s533 = sand.u32 %s137, 1
          %s534 = smul.addr %s533, 16
          %s535 = scalar_lea.vmem [#allocation8], %s534
          %537 = dma.done %s532, 256
        $region64: #{tpu_custom_call.1} parent=59 // pred_fallthru
          _
      $region60: #{tpu_custom_call.1} parent=5 // pred_fallthru
        _
    $region6: #{tpu_custom_call.1} parent=1 // loop_footer
      %s20 = sadd.s32 1, %s16
    $region7: #{tpu_custom_call.1} parent=1 // loop_footer_branch
      %15 = sbr.rel target = $region3
    $region8: #{tpu_custom_call.1} parent=1 // loop_exit
      _
    %538 = vsyncpa [#allocation6], 1
    %s539 = scalar_lea.sflag [#allocation6], 1
    %540 = vsyncpa %s539, 1
    %541 = vsyncpa [#allocation7], 1
    %s542 = scalar_lea.sflag [#allocation7], 1
    %543 = vsyncpa %s542, 1

</llo_original>
